<compile_context>
chip_gen: v5e
topology: v5e:2x2
jax: 0.10.0
libtpu: 0.0.40
codegen_flags: <defaults>
</compile_context>

<pallas_src>
import math

import jax
import jax.numpy as jnp
from jax import lax
from jax.experimental import pallas as pl
from jax.experimental.pallas import tpu as pltpu


# dot_general contracting lhs dim 1 with rhs dim 0 (natural MXU orientation).
_DN = (((1,), (0,)), ((), ()))


def gaussian_score_kernel(scal_ref, x_ref, wt_ref, b_ref, at_ref, y_ref, g_ref, o_ref):
    # scal_ref (SMEM, f32): [sigma, inv_mu, c]  with  c = (sigma / mu) / var
    sigma = scal_ref[0]
    inv_mu = scal_ref[1]
    c = scal_ref[2]

    x = x_ref[...]                              # (TB, D) f32

    # eps_phi(x, t, c) = x @ W^T + b   (W^T pre-transposed host-side, bf16 MXU,
    # f32 accumulation; bias add in f32).
    eps = lax.dot_general(x.astype(jnp.bfloat16), wt_ref[...], _DN,
                          preferred_element_type=jnp.float32) + b_ref[...]      # (TB, D)

    # x_ = (x - sigma * eps) / mu   (f32 elementwise, divide folded into inv_mu)
    x_hat = (x - sigma * eps) * inv_mu                                          # (TB, D)

    # err = y - A(x_), pre-scaled by c = (sigma/mu)/var so the gradient chain
    # below needs no further divides or rescales.
    ax = lax.dot_general(x_hat.astype(jnp.bfloat16), at_ref[...], _DN,
                         preferred_element_type=jnp.float32)                    # (TB, M)
    err_scaled = (y_ref[...] - ax) * c                                          # (TB, M)

    # Closed-form autograd through linear eps and linear A, with the backward
    # chain pre-fused host-side:  G = A @ (sigma*W - I)
    #     out = eps - sigma*s = eps + err_scaled @ G
    delta = lax.dot_general(err_scaled.astype(jnp.bfloat16), g_ref[...], _DN,
                            preferred_element_type=jnp.float32)                 # (TB, D)

    o_ref[...] = eps + delta


def gaussian_score(x, t, y, W, b, A_mat, std, gamma, eta=1e-3, block_b=128):
    """Computes VPSDE scalars (alpha='cos') host-side and launches the fused kernel."""
    B, D = x.shape
    M = A_mat.shape[0]
    block_b = min(block_b, B)
    assert B % block_b == 0, "batch must be a multiple of the batch tile"

    # VPSDE: mu(t) = alpha(t), sigma(t) = sqrt(1 - alpha(t)^2 + eta^2).
    # All scalar math in f32 (mu -> 0 as t -> 1, so 1/mu must not be bf16).
    alpha = jnp.cos(math.acos(math.sqrt(eta)) * t) ** 2
    mu = alpha
    sigma = jnp.sqrt(1.0 - alpha ** 2 + eta ** 2)
    var = std ** 2 + gamma * (sigma / mu) ** 2
    inv_mu = 1.0 / mu
    c = (sigma * inv_mu) / var
    scal = jnp.stack([sigma, inv_mu, c]).astype(jnp.float32)        # (3,) -> SMEM

    W = W.astype(jnp.float32)
    A_mat = A_mat.astype(jnp.float32)

    # Pre-transposed weights: every in-kernel dot_general contracts lhs dim1 with
    # rhs dim0 (natural MXU orientation, no transposed-RHS on the hot path).
    wt_bf = W.T.astype(jnp.bfloat16)                                 # (D, D)
    at_bf = A_mat.T.astype(jnp.bfloat16)                             # (D, M)

    # Fused backward matrix (f32, once per call, amortized over the batch):
    #   -g + sigma*(g @ W) == g @ (sigma*W - I),  g = err_scaled @ A
    #   => out = eps + err_scaled @ [A @ (sigma*W - I)]
    g_bf = (A_mat @ (sigma * W - jnp.eye(D, dtype=jnp.float32))).astype(jnp.bfloat16)  # (M, D)

    # Bias and y feed f32 elementwise math, keep f32.
    b_f32 = b.reshape(1, D).astype(jnp.float32)
    y_f32 = y.reshape(1, M).astype(jnp.float32)

    # TODO(synk): if the same t is reused over many calls, the whole forward is
    # affine in x and collapses to a single precomputed (D, D) matmul + bias.

    grid = (B // block_b,)
    const = lambda i: (0, 0)        # resident blocks (weights, bias, y): same block
    batched = lambda i: (i, 0)      # batch-tiled blocks (x, out)

    return pl.pallas_call(
        gaussian_score_kernel,
        grid=grid,
        out_shape=jax.ShapeDtypeStruct((B, D), jnp.float32),
        in_specs=[
            pl.BlockSpec((3,), lambda i: (0,),
                         memory_space=pltpu.MemorySpace.SMEM),      # scalars
            pl.BlockSpec((block_b, D), batched),                    # x          (B, D)  f32
            pl.BlockSpec((D, D), const),                            # W^T        (D, D)  bf16
            pl.BlockSpec((1, D), const),                            # b          (1, D)  f32
            pl.BlockSpec((D, M), const),                            # A^T        (D, M)  bf16
            pl.BlockSpec((1, M), const),                            # y          (1, M)  f32
            pl.BlockSpec((M, D), const),                            # G=A(sW-I)  (M, D)  bf16
        ],
        out_specs=pl.BlockSpec((block_b, D), batched),
        compiler_params=pltpu.CompilerParams(
            dimension_semantics=("parallel",)),  # batch tiles -> both TCs on v7x
    )(scal, x.astype(jnp.float32), wt_bf, b_f32, at_bf, y_f32, g_bf)


def gaussian_score_ref(x, t, y, W, b, A_mat, std, gamma, eta=1e-3):
    """Pure-JAX reference using jax.grad (mirrors the PyTorch autograd path)."""
    alpha = jnp.cos(math.acos(math.sqrt(eta)) * t) ** 2
    mu = alpha
    sigma = jnp.sqrt(1.0 - alpha ** 2 + eta ** 2)
    var = std ** 2 + gamma * (sigma / mu) ** 2

    def eps_net(xx):
        return xx @ W.T + b[None, :]

    eps = eps_net(x)

    def log_p(xx):
        e = eps_net(xx)
        x_ = (xx - sigma * e) / mu
        err = y[None, :] - x_ @ A_mat.T
        return -(err ** 2 / var).sum() / 2.0

    s = jax.grad(log_p)(x)
    return eps - sigma * s


if __name__ == "__main__":
    B, D, M = 256, 128, 128          # batch, event dim, observation dim
    eta, std, gamma = 1e-3, 0.1, 0.01

    key = jax.random.PRNGKey(0)
    kx, kw, kb, ka, ky = jax.random.split(key, 5)

    x = jax.random.normal(kx, (B, D), dtype=jnp.float32)
    W = 0.05 * jax.random.normal(kw, (D, D), dtype=jnp.float32)      # eps-net weight
    b = 0.05 * jax.random.normal(kb, (D,), dtype=jnp.float32)        # eps-net bias
    A_mat = 0.05 * jax.random.normal(ka, (M, D), dtype=jnp.float32)  # observation op
    y = jax.random.normal(ky, (M,), dtype=jnp.float32)               # observation
    t = jnp.float32(0.5)                                             # diffusion time

    out = gaussian_score(x, t, y, W, b, A_mat, std, gamma, eta)
    out = jax.block_until_ready(out)

    ref = gaussian_score_ref(x, t, y, W, b, A_mat, std, gamma, eta)
    rel_err = float(jnp.max(jnp.abs(out - ref)) / (jnp.max(jnp.abs(ref)) + 1e-6))
    assert rel_err < 5e-2, f"mismatch vs jax.grad reference: rel_err={rel_err}"

    print("KERNEL_OK")
</pallas_src>

<mosaic_0001>
module attributes {stable_mosaic.version = 11 : i64} {
  func.func @gaussian_score_kernel(%arg0: i32, %arg1: memref<3xf32, #tpu.memory_space<smem>>, %arg2: memref<128x128xf32, #tpu.memory_space<vmem>>, %arg3: memref<128x128xbf16, #tpu.memory_space<vmem>>, %arg4: memref<1x128xf32, #tpu.memory_space<vmem>>, %arg5: memref<128x128xbf16, #tpu.memory_space<vmem>>, %arg6: memref<1x128xf32, #tpu.memory_space<vmem>>, %arg7: memref<128x128xbf16, #tpu.memory_space<vmem>>, %arg8: memref<128x128xf32, #tpu.memory_space<vmem>>) attributes {dimension_semantics = [#tpu.dimension_semantics<parallel>], iteration_bounds = array<i64: 2>, scalar_prefetch = 0 : i64, scratch_operands = 0 : i64, tpu.core_type = #tpu.core_type<tc>, window_params = [{transform_indices = @transform_0, window_bounds = array<i64: 3>}, {transform_indices = @transform_1, window_bounds = array<i64: 128, 128>}, {pipeline_mode = #tpu.pipeline_mode<synchronous>, transform_indices = @transform_2, window_bounds = array<i64: 128, 128>}, {pipeline_mode = #tpu.pipeline_mode<synchronous>, transform_indices = @transform_3, window_bounds = array<i64: 1, 128>}, {pipeline_mode = #tpu.pipeline_mode<synchronous>, transform_indices = @transform_4, window_bounds = array<i64: 128, 128>}, {pipeline_mode = #tpu.pipeline_mode<synchronous>, transform_indices = @transform_5, window_bounds = array<i64: 1, 128>}, {pipeline_mode = #tpu.pipeline_mode<synchronous>, transform_indices = @transform_6, window_bounds = array<i64: 128, 128>}, {transform_indices = @transform_7, window_bounds = array<i64: 128, 128>}]} {
    %c0 = arith.constant 0 : index
    %0 = memref.load %arg1[%c0] : memref<3xf32, #tpu.memory_space<smem>>
    %c1 = arith.constant 1 : index
    %1 = memref.load %arg1[%c1] : memref<3xf32, #tpu.memory_space<smem>>
    %c2 = arith.constant 2 : index
    %2 = memref.load %arg1[%c2] : memref<3xf32, #tpu.memory_space<smem>>
    %c0_0 = arith.constant 0 : index
    %c0_1 = arith.constant 0 : index
    %3 = vector.load %arg2[%c0_0, %c0_1] : memref<128x128xf32, #tpu.memory_space<vmem>>, vector<128x128xf32>
    %4 = arith.truncf %3 : vector<128x128xf32> to vector<128x128xbf16>
    %c0_2 = arith.constant 0 : index
    %c0_3 = arith.constant 0 : index
    %5 = vector.load %arg3[%c0_2, %c0_3] : memref<128x128xbf16, #tpu.memory_space<vmem>>, vector<128x128xbf16>
    %cst = arith.constant dense<0.000000e+00> : vector<128x128xf32>
    %6 = tpu.matmul %4, %5, %cst {dimension_numbers = #tpu.dot_dimension_numbers<[1], [0], [0], [1], [0, 0, 1, 1], [], []>} : vector<128x128xbf16>, vector<128x128xbf16>, vector<128x128xf32> -> vector<128x128xf32>
    %c0_4 = arith.constant 0 : index
    %c0_5 = arith.constant 0 : index
    %7 = vector.load %arg4[%c0_4, %c0_5] : memref<1x128xf32, #tpu.memory_space<vmem>>, vector<1x128xf32>
    %8 = vector.broadcast %7 : vector<1x128xf32> to vector<128x128xf32>
    %9 = arith.addf %6, %8 : vector<128x128xf32>
    %10 = vector.broadcast %0 : f32 to vector<128x128xf32>
    %11 = arith.mulf %10, %9 : vector<128x128xf32>
    %12 = arith.subf %3, %11 : vector<128x128xf32>
    %13 = vector.broadcast %1 : f32 to vector<128x128xf32>
    %14 = arith.mulf %12, %13 : vector<128x128xf32>
    %15 = arith.truncf %14 : vector<128x128xf32> to vector<128x128xbf16>
    %c0_6 = arith.constant 0 : index
    %c0_7 = arith.constant 0 : index
    %16 = vector.load %arg5[%c0_6, %c0_7] : memref<128x128xbf16, #tpu.memory_space<vmem>>, vector<128x128xbf16>
    %cst_8 = arith.constant dense<0.000000e+00> : vector<128x128xf32>
    %17 = tpu.matmul %15, %16, %cst_8 {dimension_numbers = #tpu.dot_dimension_numbers<[1], [0], [0], [1], [0, 0, 1, 1], [], []>} : vector<128x128xbf16>, vector<128x128xbf16>, vector<128x128xf32> -> vector<128x128xf32>
    %c0_9 = arith.constant 0 : index
    %c0_10 = arith.constant 0 : index
    %18 = vector.load %arg6[%c0_9, %c0_10] : memref<1x128xf32, #tpu.memory_space<vmem>>, vector<1x128xf32>
    %19 = vector.broadcast %18 : vector<1x128xf32> to vector<128x128xf32>
    %20 = arith.subf %19, %17 : vector<128x128xf32>
    %21 = vector.broadcast %2 : f32 to vector<128x128xf32>
    %22 = arith.mulf %20, %21 : vector<128x128xf32>
    %23 = arith.truncf %22 : vector<128x128xf32> to vector<128x128xbf16>
    %c0_11 = arith.constant 0 : index
    %c0_12 = arith.constant 0 : index
    %24 = vector.load %arg7[%c0_11, %c0_12] : memref<128x128xbf16, #tpu.memory_space<vmem>>, vector<128x128xbf16>
    %cst_13 = arith.constant dense<0.000000e+00> : vector<128x128xf32>
    %25 = tpu.matmul %23, %24, %cst_13 {dimension_numbers = #tpu.dot_dimension_numbers<[1], [0], [0], [1], [0, 0, 1, 1], [], []>} : vector<128x128xbf16>, vector<128x128xbf16>, vector<128x128xf32> -> vector<128x128xf32>
    %26 = arith.addf %9, %25 : vector<128x128xf32>
    %c0_14 = arith.constant 0 : index
    %c0_15 = arith.constant 0 : index
    %27 = vector.load %arg8[%c0_14, %c0_15] : memref<128x128xf32, #tpu.memory_space<vmem>>, vector<128x128xf32>
    tpu.vector_store %arg8[%c0_14, %c0_15], %26 {strides = array<i32>} : memref<128x128xf32, #tpu.memory_space<vmem>>, vector<128x128xf32>,
    return
  }
  func.func @transform_0(%arg0: i32) -> i32 {
    %c0_i32 = arith.constant 0 : i32
    %c0_i32_0 = arith.constant 0 : i32
    return %c0_i32 : i32
  }
  func.func @transform_1(%arg0: i32) -> (i32, i32) {
    %c0_i32 = arith.constant 0 : i32
    %c0_i32_0 = arith.constant 0 : i32
    return %arg0, %c0_i32 : i32, i32
  }
  func.func @transform_2(%arg0: i32) -> (i32, i32) {
    %c0_i32 = arith.constant 0 : i32
    %c0_i32_0 = arith.constant 0 : i32
    %c0_i32_1 = arith.constant 0 : i32
    return %c0_i32, %c0_i32_0 : i32, i32
  }
  func.func @transform_3(%arg0: i32) -> (i32, i32) {
    %c0_i32 = arith.constant 0 : i32
    %c0_i32_0 = arith.constant 0 : i32
    %c0_i32_1 = arith.constant 0 : i32
    return %c0_i32, %c0_i32_0 : i32, i32
  }
  func.func @transform_4(%arg0: i32) -> (i32, i32) {
    %c0_i32 = arith.constant 0 : i32
    %c0_i32_0 = arith.constant 0 : i32
    %c0_i32_1 = arith.constant 0 : i32
    return %c0_i32, %c0_i32_0 : i32, i32
  }
  func.func @transform_5(%arg0: i32) -> (i32, i32) {
    %c0_i32 = arith.constant 0 : i32
    %c0_i32_0 = arith.constant 0 : i32
    %c0_i32_1 = arith.constant 0 : i32
    return %c0_i32, %c0_i32_0 : i32, i32
  }
  func.func @transform_6(%arg0: i32) -> (i32, i32) {
    %c0_i32 = arith.constant 0 : i32
    %c0_i32_0 = arith.constant 0 : i32
    %c0_i32_1 = arith.constant 0 : i32
    return %c0_i32, %c0_i32_0 : i32, i32
  }
  func.func @transform_7(%arg0: i32) -> (i32, i32) {
    %c0_i32 = arith.constant 0 : i32
    %c0_i32_0 = arith.constant 0 : i32
    return %arg0, %c0_i32 : i32, i32
  }
}

</mosaic_0001>

<llo_original>
// kernel: tpu_custom_call.1
$region0: #{tpu_custom_call.1}
  #allocation0 [shape = 'u32[]', space=smem, size = 0x4, offset = 0x4, fixed_abs, tag = 'smem constant byte address 0x4 - core index']
  #allocation1 [shape = 'u32[72,128]{1,0:T(1,128)}', space=vmem, size = 0x9000, scoped, tag = 'internal scratch']
  %s0 = inlined_call_operand.hbm [shape: f32[3], index: 0, kind: input, shape index: {}]
  %s1 = inlined_call_operand.hbm [shape: f32[256,128], index: 1, kind: input, shape index: {}]
  %s2 = inlined_call_operand.hbm [shape: bf16[128,128], index: 2, kind: input, shape index: {}]
  %s3 = inlined_call_operand.vmem [shape: f32[1,128], index: 3, kind: input, shape index: {}]
  %s4 = inlined_call_operand.hbm [shape: bf16[128,128], index: 4, kind: input, shape index: {}]
  %s5 = inlined_call_operand.vmem [shape: f32[1,128], index: 5, kind: input, shape index: {}]
  %s6 = inlined_call_operand.hbm [shape: bf16[128,128], index: 6, kind: input, shape index: {}]
  %s7 = inlined_call_operand.hbm [shape: f32[256,128], index: 7, kind: output, shape index: {}]
  %s8 = sld [smem:[#allocation0]]
  $region81: #{tpu_custom_call.1} parent=0
    _
  %s10 = ssub.s32 1, %s8
  %s11 = scalar_select 0, %s10, %s8
  $region1: #{tpu_custom_call.1} parent=0
    #allocation2 [shape = 'u8[512]{0}', space=smem, size = 0x200, scoped, tag = 'input window, operand 0, single buffered']
    #allocation3 [shape = 's32[2]{0}', space=sflag, size = 0x8, scoped, tag = 'scoped memory for tpu_custom_call.1']
    #allocation4 [shape = 's32[2]{0}', space=sflag, size = 0x8, scoped, tag = 'scoped memory for tpu_custom_call.1']
    #allocation5 [shape = 's32[2]{0}', space=sflag, size = 0x8, scoped, tag = 'scoped memory for tpu_custom_call.1']
    #allocation6 [shape = 'u8[131072]{0}', space=vmem, size = 0x20000, scoped, tag = 'input window, operand 1']
    #allocation7 [shape = 'u8[32768]{0}', space=vmem, size = 0x8000, scoped, tag = 'input window, operand 2, single buffered']
    #allocation8 [shape = 's32[1]{0}', space=sflag, size = 0x4, scoped, tag = 'scoped memory for tpu_custom_call.1']
    #allocation9 [shape = 'u8[32768]{0}', space=vmem, size = 0x8000, scoped, tag = 'input window, operand 4, single buffered']
    #allocation10 [shape = 'u8[32768]{0}', space=vmem, size = 0x8000, scoped, tag = 'input window, operand 6, single buffered']
    #allocation11 [shape = 's32[1]{0}', space=sflag, size = 0x4, scoped, tag = 'scoped memory for tpu_custom_call.1']
    #allocation12 [shape = 'u8[131072]{0}', space=vmem, size = 0x20000, scoped, tag = 'output window, operand 0']
    %12 = vsyncpa [#allocation5], 0
    %13 = vsyncpa [#allocation3], 0
    %s14 = scalar_lea.sflag [#allocation3], 1
    %15 = vsyncpa %s14, 0
    %16 = vsyncpa [#allocation8], 0
    %17 = vsyncpa [#allocation11], 0
    %18 = vsyncpa [#allocation4], 0
    %s19 = scalar_lea.sflag [#allocation4], 1
    %20 = vsyncpa %s19, 0
    loop: start=0, step=1, limit=4
    $region2: #{tpu_custom_call.1} parent=1 // loop_pre_header
      _
    $region3: #{tpu_custom_call.1} parent=1 // loop_header
      %s22 = sphi 0, %s26
      %p23 = scmp.ge.s32.totalorder %s22, 4
      %s30 = sphi 0, %s30
      %s32 = sphi 0, %s30
      %s33 = sphi 0, %s32
      %s47 = sphi 0, %s33
      %s53 = sphi 0, %s55
      %s56 = sphi 0, %s53
      %s57 = sphi 0, %s56
      %s73 = sphi 0, %s57
      %s77 = sphi 0, %s77
      %s79 = sphi 0, %s77
      %s80 = sphi 0, %s79
      %s94 = sphi 0, %s80
      %s98 = sphi 0, %s98
      %s100 = sphi 0, %s98
      %s101 = sphi 0, %s100
      %s115 = sphi 0, %s101
      %s119 = sphi 0, %s119
      %s121 = sphi 0, %s119
      %s122 = sphi 0, %s121
      %s136 = sphi 0, %s122
      %s140 = sphi 0, %s140
      %s142 = sphi 0, %s140
      %s143 = sphi 0, %s142
      %s157 = sphi 0, %s143
      %s161 = sphi 0, %s161
      %s163 = sphi 0, %s161
      %s164 = sphi 0, %s163
      %s178 = sphi 0, %s164
      %s184 = sphi 0, %s186
      %s187 = sphi 0, %s184
      %s188 = sphi 0, %s187
      %s204 = sphi 0, %s188
    $region4: #{tpu_custom_call.1} parent=1 // loop_header_branch
      %25 = sbr.rel (%p23) target = $region8
    $region5: #{tpu_custom_call.1} parent=1 // loop_body
      %s27 = ssub.s32 %s22, 1
      %s28 = ssub.s32 %s22, 2
      %s29 = sadd.s32 %s22, 1
      %s31 = sadd.s32 %s30, 1
      %p34 = scmp.eq.s32.totalorder %s22, 1
      %p35 = scmp.ne.s32.totalorder %s30, %s32
      %p36 = scmp.eq.s32.totalorder %s22, 0
      %p37 = por %p35, %p36
      %p38 = scmp.ne.s32.totalorder %s30, %s32
      %p39 = scmp.eq.s32.totalorder %s27, 1
      %p40 = por %p38, %p39
      %p41 = scmp.ne.s32.totalorder %s32, %s33
      %p42 = scmp.eq.s32.totalorder %s27, 0
      %p43 = por %p41, %p42
      %p44 = scmp.ne.s32.totalorder %s32, %s33
      %p45 = scmp.eq.s32.totalorder %s28, 1
      %p46 = por %p44, %p45
      %p48 = scmp.ne.s32.totalorder %s33, %s47
      %p49 = scmp.eq.s32.totalorder %s28, 0
      %p50 = por %p48, %p49
      %s51 = ssub.s32 %s22, %s29
      %p52 = scmp.eq.s32.totalorder %s51, 0
      %s54 = sadd.s32 %s53, 1
      %s55 = scalar_select %p52, %s53, %s54
      %p58 = pneg %p52
      %p59 = scmp.eq.s32.totalorder %s22, 1
      %p60 = por %p58, %p59
      %p61 = scmp.ne.s32.totalorder %s53, %s56
      %p62 = scmp.eq.s32.totalorder %s22, 0
      %p63 = por %p61, %p62
      %p64 = scmp.ne.s32.totalorder %s53, %s56
      %p65 = scmp.eq.s32.totalorder %s27, 1
      %p66 = por %p64, %p65
      %p67 = scmp.ne.s32.totalorder %s56, %s57
      %p68 = scmp.eq.s32.totalorder %s27, 0
      %p69 = por %p67, %p68
      %p70 = scmp.ne.s32.totalorder %s56, %s57
      %p71 = scmp.eq.s32.totalorder %s28, 1
      %p72 = por %p70, %p71
      %p74 = scmp.ne.s32.totalorder %s57, %s73
      %p75 = scmp.eq.s32.totalorder %s28, 0
      %p76 = por %p74, %p75
      %s78 = sadd.s32 %s77, 1
      %p81 = scmp.eq.s32.totalorder %s22, 1
      %p82 = scmp.ne.s32.totalorder %s77, %s79
      %p83 = scmp.eq.s32.totalorder %s22, 0
      %p84 = por %p82, %p83
      %p85 = scmp.ne.s32.totalorder %s77, %s79
      %p86 = scmp.eq.s32.totalorder %s27, 1
      %p87 = por %p85, %p86
      %p88 = scmp.ne.s32.totalorder %s79, %s80
      %p89 = scmp.eq.s32.totalorder %s27, 0
      %p90 = por %p88, %p89
      %p91 = scmp.ne.s32.totalorder %s79, %s80
      %p92 = scmp.eq.s32.totalorder %s28, 1
      %p93 = por %p91, %p92
      %p95 = scmp.ne.s32.totalorder %s80, %s94
      %p96 = scmp.eq.s32.totalorder %s28, 0
      %p97 = por %p95, %p96
      %s99 = sadd.s32 %s98, 1
      %p102 = scmp.eq.s32.totalorder %s22, 1
      %p103 = scmp.ne.s32.totalorder %s98, %s100
      %p104 = scmp.eq.s32.totalorder %s22, 0
      %p105 = por %p103, %p104
      %p106 = scmp.ne.s32.totalorder %s98, %s100
      %p107 = scmp.eq.s32.totalorder %s27, 1
      %p108 = por %p106, %p107
      %p109 = scmp.ne.s32.totalorder %s100, %s101
      %p110 = scmp.eq.s32.totalorder %s27, 0
      %p111 = por %p109, %p110
      %p112 = scmp.ne.s32.totalorder %s100, %s101
      %p113 = scmp.eq.s32.totalorder %s28, 1
      %p114 = por %p112, %p113
      %p116 = scmp.ne.s32.totalorder %s101, %s115
      %p117 = scmp.eq.s32.totalorder %s28, 0
      %p118 = por %p116, %p117
      %s120 = sadd.s32 %s119, 1
      %p123 = scmp.eq.s32.totalorder %s22, 1
      %p124 = scmp.ne.s32.totalorder %s119, %s121
      %p125 = scmp.eq.s32.totalorder %s22, 0
      %p126 = por %p124, %p125
      %p127 = scmp.ne.s32.totalorder %s119, %s121
      %p128 = scmp.eq.s32.totalorder %s27, 1
      %p129 = por %p127, %p128
      %p130 = scmp.ne.s32.totalorder %s121, %s122
      %p131 = scmp.eq.s32.totalorder %s27, 0
      %p132 = por %p130, %p131
      %p133 = scmp.ne.s32.totalorder %s121, %s122
      %p134 = scmp.eq.s32.totalorder %s28, 1
      %p135 = por %p133, %p134
      %p137 = scmp.ne.s32.totalorder %s122, %s136
      %p138 = scmp.eq.s32.totalorder %s28, 0
      %p139 = por %p137, %p138
      %s141 = sadd.s32 %s140, 1
      %p144 = scmp.eq.s32.totalorder %s22, 1
      %p145 = scmp.ne.s32.totalorder %s140, %s142
      %p146 = scmp.eq.s32.totalorder %s22, 0
      %p147 = por %p145, %p146
      %p148 = scmp.ne.s32.totalorder %s140, %s142
      %p149 = scmp.eq.s32.totalorder %s27, 1
      %p150 = por %p148, %p149
      %p151 = scmp.ne.s32.totalorder %s142, %s143
      %p152 = scmp.eq.s32.totalorder %s27, 0
      %p153 = por %p151, %p152
      %p154 = scmp.ne.s32.totalorder %s142, %s143
      %p155 = scmp.eq.s32.totalorder %s28, 1
      %p156 = por %p154, %p155
      %p158 = scmp.ne.s32.totalorder %s143, %s157
      %p159 = scmp.eq.s32.totalorder %s28, 0
      %p160 = por %p158, %p159
      %s162 = sadd.s32 %s161, 1
      %p165 = scmp.eq.s32.totalorder %s22, 1
      %p166 = scmp.ne.s32.totalorder %s161, %s163
      %p167 = scmp.eq.s32.totalorder %s22, 0
      %p168 = por %p166, %p167
      %p169 = scmp.ne.s32.totalorder %s161, %s163
      %p170 = scmp.eq.s32.totalorder %s27, 1
      %p171 = por %p169, %p170
      %p172 = scmp.ne.s32.totalorder %s163, %s164
      %p173 = scmp.eq.s32.totalorder %s27, 0
      %p174 = por %p172, %p173
      %p175 = scmp.ne.s32.totalorder %s163, %s164
      %p176 = scmp.eq.s32.totalorder %s28, 1
      %p177 = por %p175, %p176
      %p179 = scmp.ne.s32.totalorder %s164, %s178
      %p180 = scmp.eq.s32.totalorder %s28, 0
      %p181 = por %p179, %p180
      %s182 = ssub.s32 %s22, %s29
      %p183 = scmp.eq.s32.totalorder %s182, 0
      %s185 = sadd.s32 %s184, 1
      %s186 = scalar_select %p183, %s184, %s185
      %p189 = pneg %p183
      %p190 = scmp.eq.s32.totalorder %s22, 1
      %p191 = por %p189, %p190
      %p192 = scmp.ne.s32.totalorder %s184, %s187
      %p193 = scmp.eq.s32.totalorder %s22, 0
      %p194 = por %p192, %p193
      %p195 = scmp.ne.s32.totalorder %s184, %s187
      %p196 = scmp.eq.s32.totalorder %s27, 1
      %p197 = por %p195, %p196
      %p198 = scmp.ne.s32.totalorder %s187, %s188
      %p199 = scmp.eq.s32.totalorder %s27, 0
      %p200 = por %p198, %p199
      %p201 = scmp.ne.s32.totalorder %s187, %s188
      %p202 = scmp.eq.s32.totalorder %s28, 1
      %p203 = por %p201, %p202
      %p205 = scmp.ne.s32.totalorder %s188, %s204
      %p206 = scmp.eq.s32.totalorder %s28, 0
      %p207 = por %p205, %p206
      %p208 = scmp.le.s32.totalorder 1, %s22
      %p209 = scmp.lt.s32.totalorder %s22, 3
      %p210 = pnand %p208, %p209
      %p211 = pneg %p210
      // Predicated region
      $region9: #{tpu_custom_call.1} parent=5 // pred_check
        _
      $region10: #{tpu_custom_call.1} parent=5 // pred_check_branch
        %213 = sbr.rel (%p210) target = $region12
      $region11: #{tpu_custom_call.1} parent=5 // pred_region
        %s214 = ssub.s32 %s22, 1
        // Predicated region
        $region13: #{tpu_custom_call.1} parent=11 // pred_check
          %p215 = pneg %p43
        $region14: #{tpu_custom_call.1} parent=11 // pred_check_branch
          %217 = sbr.rel (%p215) target = $region16
        $region15: #{tpu_custom_call.1} parent=11 // pred_region
          %219 = vsyncadd [#allocation5], 0
          %s221 = sshll.u32 %s0, 4
          %s222 = int_to_ptr.hbm [resolvable:$true] %s221
          %224 = dma.hbm_to_smem %s222, 16, [#allocation2], [#allocation5]
        $region16: #{tpu_custom_call.1} parent=11 // pred_fallthru
          _
        // Predicated region
        $region17: #{tpu_custom_call.1} parent=11 // pred_check
          %p225 = pneg %p90
        $region18: #{tpu_custom_call.1} parent=11 // pred_check_branch
          %227 = sbr.rel (%p225) target = $region20
        $region19: #{tpu_custom_call.1} parent=11 // pred_region
          %229 = vsyncadd [#allocation8], 0
          %s230 = sshll.u32 %s2, 4
          %s231 = int_to_ptr.hbm [resolvable:$true] %s230
          %s232 = sshll.u32 [#allocation7], 4
          %s233 = int_to_ptr.vmem [resolvable:$true] %s232
          %238 = dma.hbm_to_vmem [thread:$0]  %s231, 1024, %s233, [#allocation8], 64, 64, 4
        $region20: #{tpu_custom_call.1} parent=11 // pred_fallthru
          _
        // Predicated region
        $region21: #{tpu_custom_call.1} parent=11 // pred_check
          %p239 = pneg %p111
        $region22: #{tpu_custom_call.1} parent=11 // pred_check_branch
          %241 = sbr.rel (%p239) target = $region24
        $region23: #{tpu_custom_call.1} parent=11 // pred_region
          _
        $region24: #{tpu_custom_call.1} parent=11 // pred_fallthru
          _
        // Predicated region
        $region25: #{tpu_custom_call.1} parent=11 // pred_check
          %p242 = pneg %p132
        $region26: #{tpu_custom_call.1} parent=11 // pred_check_branch
          %244 = sbr.rel (%p242) target = $region28
        $region27: #{tpu_custom_call.1} parent=11 // pred_region
          %246 = vsyncadd [#allocation8], 0
          %s247 = sshll.u32 %s4, 4
          %s248 = int_to_ptr.hbm [resolvable:$true] %s247
          %s249 = sshll.u32 [#allocation9], 4
          %s250 = int_to_ptr.vmem [resolvable:$true] %s249
          %255 = dma.hbm_to_vmem [thread:$0]  %s248, 1024, %s250, [#allocation8], 64, 64, 4
        $region28: #{tpu_custom_call.1} parent=11 // pred_fallthru
          _
        // Predicated region
        $region29: #{tpu_custom_call.1} parent=11 // pred_check
          %p256 = pneg %p153
        $region30: #{tpu_custom_call.1} parent=11 // pred_check_branch
          %258 = sbr.rel (%p256) target = $region32
        $region31: #{tpu_custom_call.1} parent=11 // pred_region
          _
        $region32: #{tpu_custom_call.1} parent=11 // pred_fallthru
          _
        // Predicated region
        $region33: #{tpu_custom_call.1} parent=11 // pred_check
          %p259 = pneg %p174
        $region34: #{tpu_custom_call.1} parent=11 // pred_check_branch
          %261 = sbr.rel (%p259) target = $region36
        $region35: #{tpu_custom_call.1} parent=11 // pred_region
          %263 = vsyncadd [#allocation11], 0
          %s264 = sshll.u32 %s6, 4
          %s265 = int_to_ptr.hbm [resolvable:$true] %s264
          %s266 = sshll.u32 [#allocation10], 4
          %s267 = int_to_ptr.vmem [resolvable:$true] %s266
          %272 = dma.hbm_to_vmem [thread:$0]  %s265, 1024, %s267, [#allocation11], 64, 64, 4
        $region36: #{tpu_custom_call.1} parent=11 // pred_fallthru
          _
      $region12: #{tpu_custom_call.1} parent=5 // pred_fallthru
        _
      %p273 = scmp.lt.s32.totalorder %s22, 2
      // Predicated region
      $region37: #{tpu_custom_call.1} parent=5 // pred_check
        %p274 = pneg %p273
      $region38: #{tpu_custom_call.1} parent=5 // pred_check_branch
        %276 = sbr.rel (%p274) target = $region40
      $region39: #{tpu_custom_call.1} parent=5 // pred_region
        // Predicated region
        $region41: #{tpu_custom_call.1} parent=39 // pred_check
          %p277 = pneg %p63
        $region42: #{tpu_custom_call.1} parent=39 // pred_check_branch
          %279 = sbr.rel (%p277) target = $region44
        $region43: #{tpu_custom_call.1} parent=39 // pred_region
          %s280 = sand.u32 %s53, 1
          %s281 = scalar_lea.sflag [#allocation3], %s280
          %s282 = sand.u32 %s53, 1
          %s283 = smul.addr %s282, 128
          %s284 = scalar_lea.vmem [#allocation6], %s283
          %s285 = smul.u32 16, %s22
          %287 = vsyncadd %s281, 0
          %s288 = smul.addr %s285, 8
          %s289 = scalar_lea.hbm %s1, %s288
          %s290 = sshll.u32 %s289, 4
          %s291 = int_to_ptr.hbm [resolvable:$true] %s290
          %s292 = sshll.u32 %s284, 4
          %s293 = int_to_ptr.vmem [resolvable:$true] %s292
          %298 = dma.hbm_to_vmem [thread:$0]  %s291, 2048, %s293, %s281, 128, 128, 8
        $region44: #{tpu_custom_call.1} parent=39 // pred_fallthru
          _
      $region40: #{tpu_custom_call.1} parent=5 // pred_fallthru
        _
      %p299 = scmp.le.s32.totalorder 1, %s22
      %p300 = scmp.lt.s32.totalorder %s22, 3
      %p301 = pnand %p299, %p300
      %p302 = pneg %p301
      // Predicated region
      $region45: #{tpu_custom_call.1} parent=5 // pred_check
        _
      $region46: #{tpu_custom_call.1} parent=5 // pred_check_branch
        %304 = sbr.rel (%p301) target = $region48
      $region47: #{tpu_custom_call.1} parent=5 // pred_region
        %s305 = ssub.s32 %s22, 1
        // Predicated region
        $region49: #{tpu_custom_call.1} parent=47 // pred_check
          %p306 = pneg %p43
        $region50: #{tpu_custom_call.1} parent=47 // pred_check_branch
          %308 = sbr.rel (%p306) target = $region52
        $region51: #{tpu_custom_call.1} parent=47 // pred_region
          %310 = dma.done [#allocation5], 16
        $region52: #{tpu_custom_call.1} parent=47 // pred_fallthru
          _
        %s311 = sand.u32 %s56, 1
        %s312 = scalar_lea.sflag [#allocation3], %s311
        %s313 = sand.u32 %s56, 1
        %s314 = smul.addr %s313, 128
        %s315 = scalar_lea.vmem [#allocation6], %s314
        // Predicated region
        $region53: #{tpu_custom_call.1} parent=47 // pred_check
          %p316 = pneg %p69
        $region54: #{tpu_custom_call.1} parent=47 // pred_check_branch
          %318 = sbr.rel (%p316) target = $region56
        $region55: #{tpu_custom_call.1} parent=47 // pred_region
          %320 = dma.done %s312, 2048
        $region56: #{tpu_custom_call.1} parent=47 // pred_fallthru
          _
        // Predicated region
        $region57: #{tpu_custom_call.1} parent=47 // pred_check
          %p321 = pneg %p90
        $region58: #{tpu_custom_call.1} parent=47 // pred_check_branch
          %323 = sbr.rel (%p321) target = $region60
        $region59: #{tpu_custom_call.1} parent=47 // pred_region
          %325 = dma.done [#allocation8], 1024
        $region60: #{tpu_custom_call.1} parent=47 // pred_fallthru
          _
        // Predicated region
        $region61: #{tpu_custom_call.1} parent=47 // pred_check
          %p326 = pneg %p132
        $region62: #{tpu_custom_call.1} parent=47 // pred_check_branch
          %328 = sbr.rel (%p326) target = $region64
        $region63: #{tpu_custom_call.1} parent=47 // pred_region
          %330 = dma.done [#allocation8], 1024
        $region64: #{tpu_custom_call.1} parent=47 // pred_fallthru
          _
        // Predicated region
        $region65: #{tpu_custom_call.1} parent=47 // pred_check
          %p331 = pneg %p174
        $region66: #{tpu_custom_call.1} parent=47 // pred_check_branch
          %333 = sbr.rel (%p331) target = $region68
        $region67: #{tpu_custom_call.1} parent=47 // pred_region
          %335 = dma.done [#allocation11], 1024
        $region68: #{tpu_custom_call.1} parent=47 // pred_fallthru
          _
        %336 = sfence
        %p337 = pneg %p43
        %p338 = pneg %p40
        %s339 = sand.u32 %s56, 1
        %s340 = scalar_lea.sflag [#allocation3], %s339
        %s341 = sand.u32 %s56, 1
        %s342 = smul.addr %s341, 128
        %s343 = scalar_lea.vmem [#allocation6], %s342
        %p344 = pneg %p69
        %p345 = pneg %p66
        %p346 = pneg %p90
        %p347 = pneg %p87
        %p348 = pneg %p111
        %p349 = pneg %p108
        %p350 = pneg %p132
        %p351 = pneg %p129
        %p352 = pneg %p153
        %p353 = pneg %p150
        %p354 = pneg %p174
        %p355 = pneg %p171
        %p356 = pneg %p200
        %p357 = pneg %p197
        %s358 = sand.u32 %s187, 1
        %s359 = scalar_lea.sflag [#allocation4], %s358
        %s360 = sand.u32 %s187, 1
        %s361 = smul.addr %s360, 128
        %s362 = scalar_lea.vmem [#allocation12], %s361
        %s363 = smul.u32 16, %s27
        %s364 = smul.u32 16, %s27
        %s365 = sld [smem:[#allocation2]]
        %s366 = sld [smem:[#allocation2 + $0x1]]
        %s367 = sld [smem:[#allocation2 + $0x2]]
        %v368 = vld [vmem:[%s315] sm:$0xff]
        %v369 = vld [vmem:[%s315 + $0x8] sm:$0xff]
        %v370 = vld [vmem:[%s315 + $0x10] sm:$0xff]
        %v371 = vld [vmem:[%s315 + $0x18] sm:$0xff]
        %v372 = vld [vmem:[%s315 + $0x20] sm:$0xff]
        %v373 = vld [vmem:[%s315 + $0x28] sm:$0xff]
        %v374 = vld [vmem:[%s315 + $0x30] sm:$0xff]
        %v375 = vld [vmem:[%s315 + $0x38] sm:$0xff]
        %v376 = vld [vmem:[%s315 + $0x40] sm:$0xff]
        %v377 = vld [vmem:[%s315 + $0x48] sm:$0xff]
        %v378 = vld [vmem:[%s315 + $0x50] sm:$0xff]
        %v379 = vld [vmem:[%s315 + $0x58] sm:$0xff]
        %v380 = vld [vmem:[%s315 + $0x60] sm:$0xff]
        %v381 = vld [vmem:[%s315 + $0x68] sm:$0xff]
        %v382 = vld [vmem:[%s315 + $0x70] sm:$0xff]
        %v383 = vld [vmem:[%s315 + $0x78] sm:$0xff]
        %v384 = vpack.c.bf16 %v369, %v368
        %v385 = vpack.c.bf16 %v371, %v370
        %v386 = vpack.c.bf16 %v373, %v372
        %v387 = vpack.c.bf16 %v375, %v374
        %v388 = vpack.c.bf16 %v377, %v376
        %v389 = vpack.c.bf16 %v379, %v378
        %v390 = vpack.c.bf16 %v381, %v380
        %v391 = vpack.c.bf16 %v383, %v382
        %v392 = vld [vmem:[#allocation7] sm:$0xf]
        %v393 = vld [vmem:[#allocation7 + $0x4] sm:$0xf]
        %v394 = vld [vmem:[#allocation7 + $0x8] sm:$0xf]
        %v395 = vld [vmem:[#allocation7 + $0xc] sm:$0xf]
        %v396 = vld [vmem:[#allocation7 + $0x10] sm:$0xf]
        %v397 = vld [vmem:[#allocation7 + $0x14] sm:$0xf]
        %v398 = vld [vmem:[#allocation7 + $0x18] sm:$0xf]
        %v399 = vld [vmem:[#allocation7 + $0x1c] sm:$0xf]
        %v400 = vld [vmem:[#allocation7 + $0x20] sm:$0xf]
        %v401 = vld [vmem:[#allocation7 + $0x24] sm:$0xf]
        %v402 = vld [vmem:[#allocation7 + $0x28] sm:$0xf]
        %v403 = vld [vmem:[#allocation7 + $0x2c] sm:$0xf]
        %v404 = vld [vmem:[#allocation7 + $0x30] sm:$0xf]
        %v405 = vld [vmem:[#allocation7 + $0x34] sm:$0xf]
        %v406 = vld [vmem:[#allocation7 + $0x38] sm:$0xf]
        %v407 = vld [vmem:[#allocation7 + $0x3c] sm:$0xf]
        %v408 = vld [vmem:[%s3] sm:$0x1]
        %v410 = vperm.slane %v408, 0
        %v428 = vunpack.c.l.b16 %v392
        %v429 = vunpack.c.l.b16 %v393
        %v430 = vunpack.c.l.b16 %v394
        %v431 = vunpack.c.l.b16 %v395
        %v432 = vunpack.c.l.b16 %v396
        %v433 = vunpack.c.l.b16 %v397
        %v434 = vunpack.c.l.b16 %v398
        %v435 = vunpack.c.l.b16 %v399
        %v436 = vunpack.c.l.b16 %v400
        %v437 = vunpack.c.l.b16 %v401
        %v438 = vunpack.c.l.b16 %v402
        %v439 = vunpack.c.l.b16 %v403
        %v440 = vunpack.c.l.b16 %v404
        %v441 = vunpack.c.l.b16 %v405
        %v442 = vunpack.c.l.b16 %v406
        %v443 = vunpack.c.l.b16 %v407
        %v444 = vpack.c.b16 %v429, %v428
        %v445 = vpack.c.b16 %v431, %v430
        %v446 = vpack.c.b16 %v433, %v432
        %v447 = vpack.c.b16 %v435, %v434
        %v448 = vpack.c.b16 %v437, %v436
        %v449 = vpack.c.b16 %v439, %v438
        %v450 = vpack.c.b16 %v441, %v440
        %v451 = vpack.c.b16 %v443, %v442
        %460 = vmatpush.bf16.msra.mxu0 %v451
        %461 = vmatpush.bf16.msra.mxu0 %v450
        %462 = vmatpush.bf16.msra.mxu0 %v449
        %463 = vmatpush.bf16.msra.mxu0 %v448
        %464 = vmatpush.bf16.msra.mxu0 %v447
        %465 = vmatpush.bf16.msra.mxu0 %v446
        %466 = vmatpush.bf16.msra.mxu0 %v445
        %467 = vmatpush.bf16.msra.mxu0 %v444
        %468 = vmatmul.bf16.gmra.mxu0 %v384
        %v469 = vpop.f32.mrf.mxu0
        %v470 = vadd.f32 %v410, %v469
        %v471 = vpop.f32.mrf.mxu0
        %v472 = vadd.f32 %v410, %v471
        %473 = vmatmul.bf16.gmra.mxu0 %v385
        %v474 = vpop.f32.mrf.mxu0
        %v475 = vadd.f32 %v410, %v474
        %v476 = vpop.f32.mrf.mxu0
        %v477 = vadd.f32 %v410, %v476
        %478 = vmatmul.bf16.gmra.mxu0 %v386
        %v479 = vpop.f32.mrf.mxu0
        %v480 = vadd.f32 %v410, %v479
        %v481 = vpop.f32.mrf.mxu0
        %v482 = vadd.f32 %v410, %v481
        %483 = vmatmul.bf16.gmra.mxu0 %v387
        %v484 = vpop.f32.mrf.mxu0
        %v485 = vadd.f32 %v410, %v484
        %v486 = vpop.f32.mrf.mxu0
        %v487 = vadd.f32 %v410, %v486
        %488 = vmatmul.bf16.gmra.mxu0 %v388
        %v489 = vpop.f32.mrf.mxu0
        %v490 = vadd.f32 %v410, %v489
        %v491 = vpop.f32.mrf.mxu0
        %v492 = vadd.f32 %v410, %v491
        %493 = vmatmul.bf16.gmra.mxu0 %v389
        %v494 = vpop.f32.mrf.mxu0
        %v495 = vadd.f32 %v410, %v494
        %v496 = vpop.f32.mrf.mxu0
        %v497 = vadd.f32 %v410, %v496
        %498 = vmatmul.bf16.gmra.mxu0 %v390
        %v499 = vpop.f32.mrf.mxu0
        %v500 = vadd.f32 %v410, %v499
        %v501 = vpop.f32.mrf.mxu0
        %v502 = vadd.f32 %v410, %v501
        %503 = vmatmul.bf16.gmra.mxu0 %v391
        %v504 = vpop.f32.mrf.mxu0
        %v505 = vadd.f32 %v410, %v504
        %v506 = vpop.f32.mrf.mxu0
        %v507 = vadd.f32 %v410, %v506
        %508 = vdwg.mxu0
        %v509 = vstv %s365
        %v510 = vmul.f32 %v509, %v470
        %v511 = vmul.f32 %v509, %v472
        %v512 = vmul.f32 %v509, %v475
        %v513 = vmul.f32 %v509, %v477
        %v514 = vmul.f32 %v509, %v480
        %v515 = vmul.f32 %v509, %v482
        %v516 = vmul.f32 %v509, %v485
        %v517 = vmul.f32 %v509, %v487
        %v518 = vmul.f32 %v509, %v490
        %v519 = vmul.f32 %v509, %v492
        %v520 = vmul.f32 %v509, %v495
        %v521 = vmul.f32 %v509, %v497
        %v522 = vmul.f32 %v509, %v500
        %v523 = vmul.f32 %v509, %v502
        %v524 = vmul.f32 %v509, %v505
        %v525 = vmul.f32 %v509, %v507
        %v526 = vsub.f32 %v368, %v510
        %v527 = vsub.f32 %v369, %v511
        %v528 = vsub.f32 %v370, %v512
        %v529 = vsub.f32 %v371, %v513
        %v530 = vsub.f32 %v372, %v514
        %v531 = vsub.f32 %v373, %v515
        %v532 = vsub.f32 %v374, %v516
        %v533 = vsub.f32 %v375, %v517
        %v534 = vsub.f32 %v376, %v518
        %v535 = vsub.f32 %v377, %v519
        %v536 = vsub.f32 %v378, %v520
        %v537 = vsub.f32 %v379, %v521
        %v538 = vsub.f32 %v380, %v522
        %v539 = vsub.f32 %v381, %v523
        %v540 = vsub.f32 %v382, %v524
        %v541 = vsub.f32 %v383, %v525
        %v542 = vstv %s366
        %v543 = vmul.f32 %v526, %v542
        %v544 = vmul.f32 %v527, %v542
        %v545 = vmul.f32 %v528, %v542
        %v546 = vmul.f32 %v529, %v542
        %v547 = vmul.f32 %v530, %v542
        %v548 = vmul.f32 %v531, %v542
        %v549 = vmul.f32 %v532, %v542
        %v550 = vmul.f32 %v533, %v542
        %v551 = vmul.f32 %v534, %v542
        %v552 = vmul.f32 %v535, %v542
        %v553 = vmul.f32 %v536, %v542
        %v554 = vmul.f32 %v537, %v542
        %v555 = vmul.f32 %v538, %v542
        %v556 = vmul.f32 %v539, %v542
        %v557 = vmul.f32 %v540, %v542
        %v558 = vmul.f32 %v541, %v542
        %v559 = vpack.c.bf16 %v544, %v543
        %v560 = vpack.c.bf16 %v546, %v545
        %v561 = vpack.c.bf16 %v548, %v547
        %v562 = vpack.c.bf16 %v550, %v549
        %v563 = vpack.c.bf16 %v552, %v551
        %v564 = vpack.c.bf16 %v554, %v553
        %v565 = vpack.c.bf16 %v556, %v555
        %v566 = vpack.c.bf16 %v558, %v557
        %v567 = vld [vmem:[#allocation9] sm:$0xf]
        %v568 = vld [vmem:[#allocation9 + $0x4] sm:$0xf]
        %v569 = vld [vmem:[#allocation9 + $0x8] sm:$0xf]
        %v570 = vld [vmem:[#allocation9 + $0xc] sm:$0xf]
        %v571 = vld [vmem:[#allocation9 + $0x10] sm:$0xf]
        %v572 = vld [vmem:[#allocation9 + $0x14] sm:$0xf]
        %v573 = vld [vmem:[#allocation9 + $0x18] sm:$0xf]
        %v574 = vld [vmem:[#allocation9 + $0x1c] sm:$0xf]
        %v575 = vld [vmem:[#allocation9 + $0x20] sm:$0xf]
        %v576 = vld [vmem:[#allocation9 + $0x24] sm:$0xf]
        %v577 = vld [vmem:[#allocation9 + $0x28] sm:$0xf]
        %v578 = vld [vmem:[#allocation9 + $0x2c] sm:$0xf]
        %v579 = vld [vmem:[#allocation9 + $0x30] sm:$0xf]
        %v580 = vld [vmem:[#allocation9 + $0x34] sm:$0xf]
        %v581 = vld [vmem:[#allocation9 + $0x38] sm:$0xf]
        %v582 = vld [vmem:[#allocation9 + $0x3c] sm:$0xf]
        %v599 = vunpack.c.l.b16 %v567
        %v600 = vunpack.c.l.b16 %v568
        %v601 = vunpack.c.l.b16 %v569
        %v602 = vunpack.c.l.b16 %v570
        %v603 = vunpack.c.l.b16 %v571
        %v604 = vunpack.c.l.b16 %v572
        %v605 = vunpack.c.l.b16 %v573
        %v606 = vunpack.c.l.b16 %v574
        %v607 = vunpack.c.l.b16 %v575
        %v608 = vunpack.c.l.b16 %v576
        %v609 = vunpack.c.l.b16 %v577
        %v610 = vunpack.c.l.b16 %v578
        %v611 = vunpack.c.l.b16 %v579
        %v612 = vunpack.c.l.b16 %v580
        %v613 = vunpack.c.l.b16 %v581
        %v614 = vunpack.c.l.b16 %v582
        %v615 = vpack.c.b16 %v600, %v599
        %v616 = vpack.c.b16 %v602, %v601
        %v617 = vpack.c.b16 %v604, %v603
        %v618 = vpack.c.b16 %v606, %v605
        %v619 = vpack.c.b16 %v608, %v607
        %v620 = vpack.c.b16 %v610, %v609
        %v621 = vpack.c.b16 %v612, %v611
        %v622 = vpack.c.b16 %v614, %v613
        %631 = vmatpush.bf16.msra.mxu0 %v622
        %632 = vmatpush.bf16.msra.mxu0 %v621
        %633 = vmatpush.bf16.msra.mxu0 %v620
        %634 = vmatpush.bf16.msra.mxu0 %v619
        %635 = vmatpush.bf16.msra.mxu0 %v618
        %636 = vmatpush.bf16.msra.mxu0 %v617
        %637 = vmatpush.bf16.msra.mxu0 %v616
        %638 = vmatpush.bf16.msra.mxu0 %v615
        %639 = vmatmul.bf16.gmra.mxu0 %v559
        %v640 = vpop.f32.mrf.mxu0
        %v641 = vadd.f32 0.0, %v640
        %v642 = vpop.f32.mrf.mxu0
        %v643 = vadd.f32 0.0, %v642
        %644 = vmatmul.bf16.gmra.mxu0 %v560
        %v645 = vpop.f32.mrf.mxu0
        %v646 = vadd.f32 0.0, %v645
        %v647 = vpop.f32.mrf.mxu0
        %v648 = vadd.f32 0.0, %v647
        %649 = vmatmul.bf16.gmra.mxu0 %v561
        %v650 = vpop.f32.mrf.mxu0
        %v651 = vadd.f32 0.0, %v650
        %v652 = vpop.f32.mrf.mxu0
        %v653 = vadd.f32 0.0, %v652
        %654 = vmatmul.bf16.gmra.mxu0 %v562
        %v655 = vpop.f32.mrf.mxu0
        %v656 = vadd.f32 0.0, %v655
        %v657 = vpop.f32.mrf.mxu0
        %v658 = vadd.f32 0.0, %v657
        %659 = vmatmul.bf16.gmra.mxu0 %v563
        %v660 = vpop.f32.mrf.mxu0
        %v661 = vadd.f32 0.0, %v660
        %v662 = vpop.f32.mrf.mxu0
        %v663 = vadd.f32 0.0, %v662
        %664 = vmatmul.bf16.gmra.mxu0 %v564
        %v665 = vpop.f32.mrf.mxu0
        %v666 = vadd.f32 0.0, %v665
        %v667 = vpop.f32.mrf.mxu0
        %v668 = vadd.f32 0.0, %v667
        %669 = vmatmul.bf16.gmra.mxu0 %v565
        %v670 = vpop.f32.mrf.mxu0
        %v671 = vadd.f32 0.0, %v670
        %v672 = vpop.f32.mrf.mxu0
        %v673 = vadd.f32 0.0, %v672
        %674 = vmatmul.bf16.gmra.mxu0 %v566
        %v675 = vpop.f32.mrf.mxu0
        %v676 = vadd.f32 0.0, %v675
        %v677 = vpop.f32.mrf.mxu0
        %v678 = vadd.f32 0.0, %v677
        %679 = vdwg.mxu0
        %v680 = vld [vmem:[%s5] sm:$0x1]
        %v682 = vperm.slane %v680, 0
        %v684 = vsub.f32 %v682, %v641
        %v685 = vsub.f32 %v682, %v643
        %v686 = vsub.f32 %v682, %v646
        %v687 = vsub.f32 %v682, %v648
        %v688 = vsub.f32 %v682, %v651
        %v689 = vsub.f32 %v682, %v653
        %v690 = vsub.f32 %v682, %v656
        %v691 = vsub.f32 %v682, %v658
        %v692 = vsub.f32 %v682, %v661
        %v693 = vsub.f32 %v682, %v663
        %v694 = vsub.f32 %v682, %v666
        %v695 = vsub.f32 %v682, %v668
        %v696 = vsub.f32 %v682, %v671
        %v697 = vsub.f32 %v682, %v673
        %v698 = vsub.f32 %v682, %v676
        %v699 = vsub.f32 %v682, %v678
        %v700 = vstv %s367
        %v701 = vmul.f32 %v684, %v700
        %v702 = vmul.f32 %v685, %v700
        %v703 = vmul.f32 %v686, %v700
        %v704 = vmul.f32 %v687, %v700
        %v705 = vmul.f32 %v688, %v700
        %v706 = vmul.f32 %v689, %v700
        %v707 = vmul.f32 %v690, %v700
        %v708 = vmul.f32 %v691, %v700
        %v709 = vmul.f32 %v692, %v700
        %v710 = vmul.f32 %v693, %v700
        %v711 = vmul.f32 %v694, %v700
        %v712 = vmul.f32 %v695, %v700
        %v713 = vmul.f32 %v696, %v700
        %v714 = vmul.f32 %v697, %v700
        %v715 = vmul.f32 %v698, %v700
        %v716 = vmul.f32 %v699, %v700
        %v717 = vpack.c.bf16 %v702, %v701
        %v718 = vpack.c.bf16 %v704, %v703
        %v719 = vpack.c.bf16 %v706, %v705
        %v720 = vpack.c.bf16 %v708, %v707
        %v721 = vpack.c.bf16 %v710, %v709
        %v722 = vpack.c.bf16 %v712, %v711
        %v723 = vpack.c.bf16 %v714, %v713
        %v724 = vpack.c.bf16 %v716, %v715
        %v725 = vld [vmem:[#allocation10] sm:$0xf]
        %v726 = vld [vmem:[#allocation10 + $0x4] sm:$0xf]
        %v727 = vld [vmem:[#allocation10 + $0x8] sm:$0xf]
        %v728 = vld [vmem:[#allocation10 + $0xc] sm:$0xf]
        %v729 = vld [vmem:[#allocation10 + $0x10] sm:$0xf]
        %v730 = vld [vmem:[#allocation10 + $0x14] sm:$0xf]
        %v731 = vld [vmem:[#allocation10 + $0x18] sm:$0xf]
        %v732 = vld [vmem:[#allocation10 + $0x1c] sm:$0xf]
        %v733 = vld [vmem:[#allocation10 + $0x20] sm:$0xf]
        %v734 = vld [vmem:[#allocation10 + $0x24] sm:$0xf]
        %v735 = vld [vmem:[#allocation10 + $0x28] sm:$0xf]
        %v736 = vld [vmem:[#allocation10 + $0x2c] sm:$0xf]
        %v737 = vld [vmem:[#allocation10 + $0x30] sm:$0xf]
        %v738 = vld [vmem:[#allocation10 + $0x34] sm:$0xf]
        %v739 = vld [vmem:[#allocation10 + $0x38] sm:$0xf]
        %v740 = vld [vmem:[#allocation10 + $0x3c] sm:$0xf]
        %v757 = vunpack.c.l.b16 %v725
        %v758 = vunpack.c.l.b16 %v726
        %v759 = vunpack.c.l.b16 %v727
        %v760 = vunpack.c.l.b16 %v728
        %v761 = vunpack.c.l.b16 %v729
        %v762 = vunpack.c.l.b16 %v730
        %v763 = vunpack.c.l.b16 %v731
        %v764 = vunpack.c.l.b16 %v732
        %v765 = vunpack.c.l.b16 %v733
        %v766 = vunpack.c.l.b16 %v734
        %v767 = vunpack.c.l.b16 %v735
        %v768 = vunpack.c.l.b16 %v736
        %v769 = vunpack.c.l.b16 %v737
        %v770 = vunpack.c.l.b16 %v738
        %v771 = vunpack.c.l.b16 %v739
        %v772 = vunpack.c.l.b16 %v740
        %v773 = vpack.c.b16 %v758, %v757
        %v774 = vpack.c.b16 %v760, %v759
        %v775 = vpack.c.b16 %v762, %v761
        %v776 = vpack.c.b16 %v764, %v763
        %v777 = vpack.c.b16 %v766, %v765
        %v778 = vpack.c.b16 %v768, %v767
        %v779 = vpack.c.b16 %v770, %v769
        %v780 = vpack.c.b16 %v772, %v771
        %789 = vmatpush.bf16.msra.mxu0 %v780
        %790 = vmatpush.bf16.msra.mxu0 %v779
        %791 = vmatpush.bf16.msra.mxu0 %v778
        %792 = vmatpush.bf16.msra.mxu0 %v777
        %793 = vmatpush.bf16.msra.mxu0 %v776
        %794 = vmatpush.bf16.msra.mxu0 %v775
        %795 = vmatpush.bf16.msra.mxu0 %v774
        %796 = vmatpush.bf16.msra.mxu0 %v773
        %797 = vmatmul.bf16.gmra.mxu0 %v717
        %v798 = vpop.f32.mrf.mxu0
        %v799 = vadd.f32 0.0, %v798
        %v800 = vpop.f32.mrf.mxu0
        %v801 = vadd.f32 0.0, %v800
        %802 = vmatmul.bf16.gmra.mxu0 %v718
        %v803 = vpop.f32.mrf.mxu0
        %v804 = vadd.f32 0.0, %v803
        %v805 = vpop.f32.mrf.mxu0
        %v806 = vadd.f32 0.0, %v805
        %807 = vmatmul.bf16.gmra.mxu0 %v719
        %v808 = vpop.f32.mrf.mxu0
        %v809 = vadd.f32 0.0, %v808
        %v810 = vpop.f32.mrf.mxu0
        %v811 = vadd.f32 0.0, %v810
        %812 = vmatmul.bf16.gmra.mxu0 %v720
        %v813 = vpop.f32.mrf.mxu0
        %v814 = vadd.f32 0.0, %v813
        %v815 = vpop.f32.mrf.mxu0
        %v816 = vadd.f32 0.0, %v815
        %817 = vmatmul.bf16.gmra.mxu0 %v721
        %v818 = vpop.f32.mrf.mxu0
        %v819 = vadd.f32 0.0, %v818
        %v820 = vpop.f32.mrf.mxu0
        %v821 = vadd.f32 0.0, %v820
        %822 = vmatmul.bf16.gmra.mxu0 %v722
        %v823 = vpop.f32.mrf.mxu0
        %v824 = vadd.f32 0.0, %v823
        %v825 = vpop.f32.mrf.mxu0
        %v826 = vadd.f32 0.0, %v825
        %827 = vmatmul.bf16.gmra.mxu0 %v723
        %v828 = vpop.f32.mrf.mxu0
        %v829 = vadd.f32 0.0, %v828
        %v830 = vpop.f32.mrf.mxu0
        %v831 = vadd.f32 0.0, %v830
        %832 = vmatmul.bf16.gmra.mxu0 %v724
        %v833 = vpop.f32.mrf.mxu0
        %v834 = vadd.f32 0.0, %v833
        %v835 = vpop.f32.mrf.mxu0
        %v836 = vadd.f32 0.0, %v835
        %837 = vdwg.mxu0
        %v838 = vadd.f32 %v470, %v799
        %v839 = vadd.f32 %v472, %v801
        %v840 = vadd.f32 %v475, %v804
        %v841 = vadd.f32 %v477, %v806
        %v842 = vadd.f32 %v480, %v809
        %v843 = vadd.f32 %v482, %v811
        %v844 = vadd.f32 %v485, %v814
        %v845 = vadd.f32 %v487, %v816
        %v846 = vadd.f32 %v490, %v819
        %v847 = vadd.f32 %v492, %v821
        %v848 = vadd.f32 %v495, %v824
        %v849 = vadd.f32 %v497, %v826
        %v850 = vadd.f32 %v500, %v829
        %v851 = vadd.f32 %v502, %v831
        %v852 = vadd.f32 %v505, %v834
        %v853 = vadd.f32 %v507, %v836
        %854 = vst [vmem:[%s362] sm:$0xff] %v838
        %855 = vst [vmem:[%s362 + $0x8] sm:$0xff] %v839
        %856 = vst [vmem:[%s362 + $0x10] sm:$0xff] %v840
        %857 = vst [vmem:[%s362 + $0x18] sm:$0xff] %v841
        %858 = vst [vmem:[%s362 + $0x20] sm:$0xff] %v842
        %859 = vst [vmem:[%s362 + $0x28] sm:$0xff] %v843
        %860 = vst [vmem:[%s362 + $0x30] sm:$0xff] %v844
        %861 = vst [vmem:[%s362 + $0x38] sm:$0xff] %v845
        %862 = vst [vmem:[%s362 + $0x40] sm:$0xff] %v846
        %863 = vst [vmem:[%s362 + $0x48] sm:$0xff] %v847
        %864 = vst [vmem:[%s362 + $0x50] sm:$0xff] %v848
        %865 = vst [vmem:[%s362 + $0x58] sm:$0xff] %v849
        %866 = vst [vmem:[%s362 + $0x60] sm:$0xff] %v850
        %867 = vst [vmem:[%s362 + $0x68] sm:$0xff] %v851
        %868 = vst [vmem:[%s362 + $0x70] sm:$0xff] %v852
        %869 = vst [vmem:[%s362 + $0x78] sm:$0xff] %v853
        %s870 = sand.u32 %s187, 1
        %s871 = scalar_lea.sflag [#allocation4], %s870
        %s872 = sand.u32 %s187, 1
        %s873 = smul.addr %s872, 128
        %s874 = scalar_lea.vmem [#allocation12], %s873
        // Predicated region
        $region69: #{tpu_custom_call.1} parent=47 // pred_check
          %p875 = pneg %p197
        $region70: #{tpu_custom_call.1} parent=47 // pred_check_branch
          %877 = sbr.rel (%p875) target = $region72
        $region71: #{tpu_custom_call.1} parent=47 // pred_region
          %s878 = smul.u32 16, %s27
          %880 = vsyncadd %s871, 0
          %s881 = smul.addr %s878, 8
          %s882 = scalar_lea.hbm %s7, %s881
          %s883 = sshll.u32 %s874, 4
          %s884 = int_to_ptr.vmem [resolvable:$true] %s883
          %s885 = sshll.u32 %s882, 4
          %s886 = int_to_ptr.hbm [resolvable:$true] %s885
          %891 = dma.vmem_to_hbm [thread:$0]  %s884, 2048, %s886, %s871, 128, 128, 8
        $region72: #{tpu_custom_call.1} parent=47 // pred_fallthru
          _
      $region48: #{tpu_custom_call.1} parent=5 // pred_fallthru
        _
      %p892 = scmp.le.s32.totalorder 2, %s22
      // Predicated region
      $region73: #{tpu_custom_call.1} parent=5 // pred_check
        %p893 = pneg %p892
      $region74: #{tpu_custom_call.1} parent=5 // pred_check_branch
        %895 = sbr.rel (%p893) target = $region76
      $region75: #{tpu_custom_call.1} parent=5 // pred_region
        %s896 = ssub.s32 %s22, 2
        // Predicated region
        $region77: #{tpu_custom_call.1} parent=75 // pred_check
          %p897 = pneg %p203
        $region78: #{tpu_custom_call.1} parent=75 // pred_check_branch
          %899 = sbr.rel (%p897) target = $region80
        $region79: #{tpu_custom_call.1} parent=75 // pred_region
          %s900 = sand.u32 %s188, 1
          %s901 = scalar_lea.sflag [#allocation4], %s900
          %s902 = sand.u32 %s188, 1
          %s903 = smul.addr %s902, 128
          %s904 = scalar_lea.vmem [#allocation12], %s903
          %906 = dma.done %s901, 2048
        $region80: #{tpu_custom_call.1} parent=75 // pred_fallthru
          _
      $region76: #{tpu_custom_call.1} parent=5 // pred_fallthru
        _
    $region6: #{tpu_custom_call.1} parent=1 // loop_footer
      %s26 = sadd.s32 1, %s22
    $region7: #{tpu_custom_call.1} parent=1 // loop_footer_branch
      %21 = sbr.rel target = $region3
    $region8: #{tpu_custom_call.1} parent=1 // loop_exit
      _
    %907 = vsyncpa [#allocation3], 1
    %s908 = scalar_lea.sflag [#allocation3], 1
    %909 = vsyncpa %s908, 1
    %910 = vsyncpa [#allocation8], 1
    %911 = vsyncpa [#allocation11], 1
    %912 = vsyncpa [#allocation4], 1
    %s913 = scalar_lea.sflag [#allocation4], 1
    %914 = vsyncpa %s913, 1
    %915 = vsyncpa [#allocation5], 1
    %s916 = scalar_lea.sflag [#allocation5], 1
    %917 = vsyncpa %s916, 1

</llo_original>
